<compile_context>
chip_gen: v5e
topology: v5e:2x2
jax: 0.10.0
libtpu: 0.0.40
codegen_flags: <defaults>
</compile_context>

<pallas_src>
import jax
import jax.numpy as jnp
from jax.experimental import pallas as pl
from jax.experimental.pallas import tpu as pltpu


def _round_up(n, m):
    return ((n + m - 1) // m) * m


def contrastive_mlp_kernel(x_ref, w1_ref, b1_ref, w2_ref, b2_ref,
                           w3_ref, b3_ref, o_ref):
    # x arrives in native f32 (single HBM pass); cast to bf16 in-vreg for MXU.
    x_bf16 = x_ref[...].astype(jnp.bfloat16)

    # fc1 + relu : bf16 operands, f32 accumulate, f32 elementwise.
    h1 = jnp.dot(x_bf16, w1_ref[...], preferred_element_type=jnp.float32)
    h1 = jnp.maximum(h1 + b1_ref[...], 0.0)

    # fc2 + relu
    h2 = jnp.dot(h1.astype(jnp.bfloat16), w2_ref[...],
                 preferred_element_type=jnp.float32)
    h2 = jnp.maximum(h2 + b2_ref[...], 0.0)

    # fc3 + sigmoid, lane-dense tail.
    # View h2 (TILE_B, H1) as (TILE_B//128, 128, H1): a tile-aligned split of
    # the sublane dim (128 % 8 == 0), so no data movement.  The 1-wide fc3 is
    # a per-row dot with a short f32 vector -> broadcast multiply + lane
    # reduce, producing a dense (TILE_B//128, 128) result instead of a
    # lane-sparse (TILE_B, 1) column.
    tile_b, h1dim = h2.shape
    h2_3d = h2.reshape(tile_b // 128, 128, h1dim)
    logits = jnp.sum(h2_3d * w3_ref[...], axis=-1)          # (Tr, 128) f32
    o_ref[...] = jax.nn.sigmoid(logits + b3_ref[...])


def contrastive_model_forward(x, params, *, tile_b=8192):
    """x: (B, input_dim) float32. params: dict (weights stored as (in, out))."""
    w1 = params["w1"].astype(jnp.bfloat16)
    w2 = params["w2"].astype(jnp.bfloat16)
    b1, b2, b3 = params["b1"], params["b2"], params["b3"]

    B, input_dim = x.shape
    hidden_dim = w1.shape[1]
    hidden_dim_1 = w2.shape[1]
    # fc3 weight as an f32 row vector for the lane-dense tail.
    w3_row = params["w3"].reshape(1, hidden_dim_1).astype(jnp.float32)

    # Tile selection: n_tiles = cdiv(B, tile_b), tile sized to the actual work
    # (minimises padding waste).  For multi-tile grids align to 1024 so the
    # (TILE_B//128, 128) output block keeps a sublane dim that is a multiple
    # of 8; single-tile grids only need 128 alignment (block == full array).
    n_tiles = pl.cdiv(B, tile_b)
    align = 128 if n_tiles == 1 else 1024
    TILE_B = _round_up(pl.cdiv(B, n_tiles), align)
    B_pad = n_tiles * TILE_B

    # Pad only when needed (padded rows just run sigmoid(b3) and are sliced).
    x_in = jnp.pad(x, ((0, B_pad - B), (0, 0))) if B_pad != B else x

    # Truthful scheduler hint: x streamed as f32, tiny f32 output, resident
    # bf16/f32 weights.
    bytes_accessed = (
        B_pad * input_dim * 4 + B_pad * 4
        + (input_dim * hidden_dim + hidden_dim * hidden_dim_1) * 2
        + (hidden_dim + hidden_dim_1 + hidden_dim_1 + 1) * 4
    )
    cost = pl.CostEstimate(
        flops=2 * B_pad * (input_dim * hidden_dim
                           + hidden_dim * hidden_dim_1
                           + hidden_dim_1 * 1),
        transcendentals=B_pad,  # sigmoid
        bytes_accessed=bytes_accessed,
    )

    const = lambda i: (0, 0)  # weights/biases stay VMEM-resident across steps

    out2d = pl.pallas_call(
        contrastive_mlp_kernel,
        out_shape=jax.ShapeDtypeStruct((B_pad // 128, 128), jnp.float32),
        grid_spec=pltpu.PrefetchScalarGridSpec(
            num_scalar_prefetch=0,
            grid=(n_tiles,),
            in_specs=[
                pl.BlockSpec((TILE_B, input_dim), lambda i: (i, 0)),   # x tile
                pl.BlockSpec((input_dim, hidden_dim), const),          # w1
                pl.BlockSpec((1, hidden_dim), const),                  # b1
                pl.BlockSpec((hidden_dim, hidden_dim_1), const),       # w2
                pl.BlockSpec((1, hidden_dim_1), const),                # b2
                pl.BlockSpec((1, hidden_dim_1), const),                # w3 (row)
                pl.BlockSpec((1, 1), const),                           # b3
            ],
            out_specs=pl.BlockSpec((TILE_B // 128, 128), lambda i: (i, 0)),
        ),
        compiler_params=pltpu.CompilerParams(
            # On v7x, consider pltpu.CORE_PARALLEL here if a profile shows one
            # TensorCore idle; "parallel" is the portable default.
            dimension_semantics=("parallel",),
            vmem_limit_bytes=48 * 1024 * 1024,
        ),
        cost_estimate=cost,
    )(x_in, w1, b1, w2, b2, w3_row, b3)

    out = out2d.reshape(B_pad, 1)
    return out[:B] if B_pad != B else out


def init_params(key, input_dim, hidden_dim, hidden_dim_1):
    """Deterministic synthetic init (uniform fan-in scaling, like torch Linear)."""
    ks = jax.random.split(key, 8)

    def linear(kw, kb, fan_in, fan_out):
        bound = 1.0 / jnp.sqrt(float(fan_in))
        # stored as (in, out) so kernel does x @ W
        w = jax.random.uniform(kw, (fan_in, fan_out), jnp.float32, -bound, bound)
        b = jax.random.uniform(kb, (1, fan_out), jnp.float32, -bound, bound)
        return w, b

    w1, b1 = linear(ks[0], ks[1], input_dim, hidden_dim)
    w2, b2 = linear(ks[2], ks[3], hidden_dim, hidden_dim_1)
    w3, b3 = linear(ks[4], ks[5], hidden_dim_1, 1)
    # fc4 exists in __init__ but is unused in forward; kept for parity.
    w4, b4 = linear(ks[6], ks[7], 128, 2)
    return {"w1": w1, "b1": b1, "w2": w2, "b2": b2,
            "w3": w3, "b3": b3, "w4": w4, "b4": b4}


def reference_forward(x, p):
    """Mirrors the kernel's numerics (bf16 fc1/fc2 operands, f32 acc, f32 fc3)."""
    xb = x.astype(jnp.bfloat16)
    w1 = p["w1"].astype(jnp.bfloat16)
    w2 = p["w2"].astype(jnp.bfloat16)
    h1 = jnp.maximum(
        jnp.dot(xb, w1, preferred_element_type=jnp.float32) + p["b1"], 0.0)
    h2 = jnp.maximum(
        jnp.dot(h1.astype(jnp.bfloat16), w2,
                preferred_element_type=jnp.float32) + p["b2"], 0.0)
    return jax.nn.sigmoid(jnp.dot(h2, p["w3"]) + p["b3"])


if __name__ == "__main__":
    key = jax.random.PRNGKey(0)
    k_x, k_p = jax.random.split(key)

    # Small shapes; B=10 deliberately exercises the pad-to-tile path.
    B, input_dim, hidden_dim, hidden_dim_1 = 10, 32, 64, 32
    x = jax.random.normal(k_x, (B, input_dim), jnp.float32)
    params = init_params(k_p, input_dim, hidden_dim, hidden_dim_1)

    out = contrastive_model_forward(x, params)
    out = jax.block_until_ready(out)

    ref = reference_forward(x, params)
    assert out.shape == (B, 1)
    assert jnp.allclose(out, ref, atol=2e-3, rtol=2e-3)

    print("KERNEL_OK")
</pallas_src>

<mosaic_0001>
module attributes {stable_mosaic.version = 11 : i64} {
  func.func @contrastive_mlp_kernel(%arg0: i32, %arg1: memref<128x32xf32, #tpu.memory_space<vmem>>, %arg2: memref<32x64xbf16, #tpu.memory_space<vmem>>, %arg3: memref<1x64xf32, #tpu.memory_space<vmem>>, %arg4: memref<64x32xbf16, #tpu.memory_space<vmem>>, %arg5: memref<1x32xf32, #tpu.memory_space<vmem>>, %arg6: memref<1x32xf32, #tpu.memory_space<vmem>>, %arg7: memref<1x1xf32, #tpu.memory_space<vmem>>, %arg8: memref<1x128xf32, #tpu.memory_space<vmem>>) attributes {dimension_semantics = [#tpu.dimension_semantics<parallel>], iteration_bounds = array<i64: 1>, scalar_prefetch = 0 : i64, scratch_operands = 0 : i64, tpu.core_type = #tpu.core_type<tc>, window_params = [{transform_indices = @transform_0, window_bounds = array<i64: 128, 32>}, {pipeline_mode = #tpu.pipeline_mode<synchronous>, transform_indices = @transform_1, window_bounds = array<i64: 32, 64>}, {pipeline_mode = #tpu.pipeline_mode<synchronous>, transform_indices = @transform_2, window_bounds = array<i64: 1, 64>}, {pipeline_mode = #tpu.pipeline_mode<synchronous>, transform_indices = @transform_3, window_bounds = array<i64: 64, 32>}, {pipeline_mode = #tpu.pipeline_mode<synchronous>, transform_indices = @transform_4, window_bounds = array<i64: 1, 32>}, {pipeline_mode = #tpu.pipeline_mode<synchronous>, transform_indices = @transform_5, window_bounds = array<i64: 1, 32>}, {pipeline_mode = #tpu.pipeline_mode<synchronous>, transform_indices = @transform_6, window_bounds = array<i64: 1, 1>}, {transform_indices = @transform_7, window_bounds = array<i64: 1, 128>}]} {
    %c0 = arith.constant 0 : index
    %c0_0 = arith.constant 0 : index
    %0 = vector.load %arg1[%c0, %c0_0] : memref<128x32xf32, #tpu.memory_space<vmem>>, vector<128x32xf32>
    %1 = arith.truncf %0 : vector<128x32xf32> to vector<128x32xbf16>
    %c0_1 = arith.constant 0 : index
    %c0_2 = arith.constant 0 : index
    %2 = vector.load %arg2[%c0_1, %c0_2] : memref<32x64xbf16, #tpu.memory_space<vmem>>, vector<32x64xbf16>
    %cst = arith.constant dense<0.000000e+00> : vector<128x64xf32>
    %3 = tpu.matmul %1, %2, %cst {dimension_numbers = #tpu.dot_dimension_numbers<[1], [0], [0], [1], [0, 0, 1, 1], [], []>} : vector<128x32xbf16>, vector<32x64xbf16>, vector<128x64xf32> -> vector<128x64xf32>
    %c0_3 = arith.constant 0 : index
    %c0_4 = arith.constant 0 : index
    %4 = vector.load %arg3[%c0_3, %c0_4] : memref<1x64xf32, #tpu.memory_space<vmem>>, vector<1x64xf32>
    %5 = vector.broadcast %4 : vector<1x64xf32> to vector<128x64xf32>
    %6 = arith.addf %3, %5 : vector<128x64xf32>
    %cst_5 = arith.constant 0.000000e+00 : f32
    %7 = vector.broadcast %cst_5 : f32 to vector<128x64xf32>
    %8 = arith.maximumf %6, %7 : vector<128x64xf32>
    %9 = arith.truncf %8 : vector<128x64xf32> to vector<128x64xbf16>
    %c0_6 = arith.constant 0 : index
    %c0_7 = arith.constant 0 : index
    %10 = vector.load %arg4[%c0_6, %c0_7] : memref<64x32xbf16, #tpu.memory_space<vmem>>, vector<64x32xbf16>
    %cst_8 = arith.constant dense<0.000000e+00> : vector<128x32xf32>
    %11 = tpu.matmul %9, %10, %cst_8 {dimension_numbers = #tpu.dot_dimension_numbers<[1], [0], [0], [1], [0, 0, 1, 1], [], []>} : vector<128x64xbf16>, vector<64x32xbf16>, vector<128x32xf32> -> vector<128x32xf32>
    %c0_9 = arith.constant 0 : index
    %c0_10 = arith.constant 0 : index
    %12 = vector.load %arg5[%c0_9, %c0_10] : memref<1x32xf32, #tpu.memory_space<vmem>>, vector<1x32xf32>
    %13 = vector.broadcast %12 : vector<1x32xf32> to vector<128x32xf32>
    %14 = arith.addf %11, %13 : vector<128x32xf32>
    %cst_11 = arith.constant 0.000000e+00 : f32
    %15 = vector.broadcast %cst_11 : f32 to vector<128x32xf32>
    %16 = arith.maximumf %14, %15 : vector<128x32xf32>
    %17 = vector.shape_cast %16 : vector<128x32xf32> to vector<1x128x32xf32>
    %c0_12 = arith.constant 0 : index
    %c0_13 = arith.constant 0 : index
    %18 = vector.load %arg6[%c0_12, %c0_13] : memref<1x32xf32, #tpu.memory_space<vmem>>, vector<1x32xf32>
    %19 = vector.shape_cast %18 : vector<1x32xf32> to vector<1x1x32xf32>
    %20 = vector.broadcast %19 : vector<1x1x32xf32> to vector<1x128x32xf32>
    %21 = arith.mulf %17, %20 : vector<1x128x32xf32>
    %cst_14 = arith.constant dense<0.000000e+00> : vector<1x128xf32>
    %22 = vector.multi_reduction <add>, %21, %cst_14 [2] : vector<1x128x32xf32> to vector<1x128xf32>
    %c0_15 = arith.constant 0 : index
    %c0_16 = arith.constant 0 : index
    %23 = vector.load %arg7[%c0_15, %c0_16] : memref<1x1xf32, #tpu.memory_space<vmem>>, vector<1x1xf32>
    %24 = vector.broadcast %23 : vector<1x1xf32> to vector<1x128xf32>
    %25 = arith.addf %22, %24 : vector<1x128xf32>
    %26 = arith.negf %25 : vector<1x128xf32>
    %27 = math.exp %26 : vector<1x128xf32>
    %cst_17 = arith.constant 1.000000e+00 : f32
    %28 = vector.broadcast %cst_17 : f32 to vector<1x128xf32>
    %29 = arith.addf %28, %27 : vector<1x128xf32>
    %30 = arith.divf %28, %29 : vector<1x128xf32>
    %c0_18 = arith.constant 0 : index
    %c0_19 = arith.constant 0 : index
    %31 = vector.load %arg8[%c0_18, %c0_19] : memref<1x128xf32, #tpu.memory_space<vmem>>, vector<1x128xf32>
    tpu.vector_store %arg8[%c0_18, %c0_19], %30 {strides = array<i32>} : memref<1x128xf32, #tpu.memory_space<vmem>>, vector<1x128xf32>,
    return
  }
  func.func @transform_0(%arg0: i32) -> (i32, i32) {
    %c0_i32 = arith.constant 0 : i32
    %c0_i32_0 = arith.constant 0 : i32
    return %arg0, %c0_i32 : i32, i32
  }
  func.func @transform_1(%arg0: i32) -> (i32, i32) {
    %c0_i32 = arith.constant 0 : i32
    %c0_i32_0 = arith.constant 0 : i32
    %c0_i32_1 = arith.constant 0 : i32
    return %c0_i32, %c0_i32_0 : i32, i32
  }
  func.func @transform_2(%arg0: i32) -> (i32, i32) {
    %c0_i32 = arith.constant 0 : i32
    %c0_i32_0 = arith.constant 0 : i32
    %c0_i32_1 = arith.constant 0 : i32
    return %c0_i32, %c0_i32_0 : i32, i32
  }
  func.func @transform_3(%arg0: i32) -> (i32, i32) {
    %c0_i32 = arith.constant 0 : i32
    %c0_i32_0 = arith.constant 0 : i32
    %c0_i32_1 = arith.constant 0 : i32
    return %c0_i32, %c0_i32_0 : i32, i32
  }
  func.func @transform_4(%arg0: i32) -> (i32, i32) {
    %c0_i32 = arith.constant 0 : i32
    %c0_i32_0 = arith.constant 0 : i32
    %c0_i32_1 = arith.constant 0 : i32
    return %c0_i32, %c0_i32_0 : i32, i32
  }
  func.func @transform_5(%arg0: i32) -> (i32, i32) {
    %c0_i32 = arith.constant 0 : i32
    %c0_i32_0 = arith.constant 0 : i32
    %c0_i32_1 = arith.constant 0 : i32
    return %c0_i32, %c0_i32_0 : i32, i32
  }
  func.func @transform_6(%arg0: i32) -> (i32, i32) {
    %c0_i32 = arith.constant 0 : i32
    %c0_i32_0 = arith.constant 0 : i32
    %c0_i32_1 = arith.constant 0 : i32
    return %c0_i32, %c0_i32_0 : i32, i32
  }
  func.func @transform_7(%arg0: i32) -> (i32, i32) {
    %c0_i32 = arith.constant 0 : i32
    %c0_i32_0 = arith.constant 0 : i32
    return %arg0, %c0_i32 : i32, i32
  }
}

</mosaic_0001>

<llo_original>
// kernel: tpu_custom_call.1
$region0: #{tpu_custom_call.1}
  #allocation0 [shape = 'u32[]', space=smem, size = 0x4, offset = 0x4, fixed_abs, tag = 'smem constant byte address 0x4 - core index']
  #allocation1 [shape = 'u32[72,128]{1,0:T(1,128)}', space=vmem, size = 0x9000, scoped, tag = 'internal scratch']
  #allocation2 [shape = 'f32[1,1]{1,0:T(1,128)S(1)}', space=vmem, size = 0x200, scoped, tag = 'scoped memory for tpu_custom_call.1']
  %s0 = inlined_call_operand.vmem [shape: f32[128,32], index: 0, kind: input, shape index: {}]
  %s1 = inlined_call_operand.vmem [shape: bf16[32,64], index: 1, kind: input, shape index: {}]
  %s2 = inlined_call_operand.vmem [shape: f32[1,64], index: 2, kind: input, shape index: {}]
  %s3 = inlined_call_operand.vmem [shape: bf16[64,32], index: 3, kind: input, shape index: {}]
  %s4 = inlined_call_operand.vmem [shape: f32[1,32], index: 4, kind: input, shape index: {}]
  %s5 = inlined_call_operand.vmem [shape: f32[1,32], index: 5, kind: input, shape index: {}]
  %s6 = inlined_call_operand.<no memory space> [shape: f32[1,1], index: 6, kind: input, shape index: {}]
  %s7 = inlined_call_operand.hbm [shape: f32[1,128], index: 7, kind: output, shape index: {}]
  %s8 = sld [smem:[#allocation0]]
  $region38: #{tpu_custom_call.1} parent=0
    _
  %s10 = ssub.s32 1, %s8
  %s11 = scalar_select 0, %s10, %s8
  %v12 = vstv %s6
  %13 = vst [vmem:[#allocation2] sm:$0x1] %v12
  $region1: #{tpu_custom_call.1} parent=0
    #allocation3 [shape = 'u8[512]{0}', space=vmem, size = 0x400, scoped, tag = 'output window, operand 0, single buffered']
    #allocation4 [shape = 's32[1]{0}', space=sflag, size = 0x4, scoped, tag = 'scoped memory for tpu_custom_call.1']
    %14 = vsyncpa [#allocation4], 0
    // Predicated region
    $region2: #{tpu_custom_call.1} parent=1 // pred_check
      _
    $region3: #{tpu_custom_call.1} parent=1 // pred_check_branch
      %16 = sbr.rel (0) target = $region5
    $region4: #{tpu_custom_call.1} parent=1 // pred_region
      _
    $region5: #{tpu_custom_call.1} parent=1 // pred_fallthru
      _
    // Predicated region
    $region6: #{tpu_custom_call.1} parent=1 // pred_check
      _
    $region7: #{tpu_custom_call.1} parent=1 // pred_check_branch
      %18 = sbr.rel (0) target = $region9
    $region8: #{tpu_custom_call.1} parent=1 // pred_region
      _
    $region9: #{tpu_custom_call.1} parent=1 // pred_fallthru
      _
    // Predicated region
    $region10: #{tpu_custom_call.1} parent=1 // pred_check
      _
    $region11: #{tpu_custom_call.1} parent=1 // pred_check_branch
      %20 = sbr.rel (0) target = $region13
    $region12: #{tpu_custom_call.1} parent=1 // pred_region
      _
    $region13: #{tpu_custom_call.1} parent=1 // pred_fallthru
      _
    // Predicated region
    $region14: #{tpu_custom_call.1} parent=1 // pred_check
      _
    $region15: #{tpu_custom_call.1} parent=1 // pred_check_branch
      %22 = sbr.rel (0) target = $region17
    $region16: #{tpu_custom_call.1} parent=1 // pred_region
      _
    $region17: #{tpu_custom_call.1} parent=1 // pred_fallthru
      _
    // Predicated region
    $region18: #{tpu_custom_call.1} parent=1 // pred_check
      _
    $region19: #{tpu_custom_call.1} parent=1 // pred_check_branch
      %24 = sbr.rel (0) target = $region21
    $region20: #{tpu_custom_call.1} parent=1 // pred_region
      _
    $region21: #{tpu_custom_call.1} parent=1 // pred_fallthru
      _
    // Predicated region
    $region22: #{tpu_custom_call.1} parent=1 // pred_check
      _
    $region23: #{tpu_custom_call.1} parent=1 // pred_check_branch
      %26 = sbr.rel (0) target = $region25
    $region24: #{tpu_custom_call.1} parent=1 // pred_region
      _
    $region25: #{tpu_custom_call.1} parent=1 // pred_fallthru
      _
    // Predicated region
    $region26: #{tpu_custom_call.1} parent=1 // pred_check
      _
    $region27: #{tpu_custom_call.1} parent=1 // pred_check_branch
      %28 = sbr.rel (0) target = $region29
    $region28: #{tpu_custom_call.1} parent=1 // pred_region
      _
    $region29: #{tpu_custom_call.1} parent=1 // pred_fallthru
      _
    %v30 = vld [vmem:[%s0] sm:$0xff]
    %v31 = vld [vmem:[%s0 + $0x8] sm:$0xff]
    %v32 = vld [vmem:[%s0 + $0x10] sm:$0xff]
    %v33 = vld [vmem:[%s0 + $0x18] sm:$0xff]
    %v34 = vld [vmem:[%s0 + $0x20] sm:$0xff]
    %v35 = vld [vmem:[%s0 + $0x28] sm:$0xff]
    %v36 = vld [vmem:[%s0 + $0x30] sm:$0xff]
    %v37 = vld [vmem:[%s0 + $0x38] sm:$0xff]
    %v38 = vld [vmem:[%s0 + $0x40] sm:$0xff]
    %v39 = vld [vmem:[%s0 + $0x48] sm:$0xff]
    %v40 = vld [vmem:[%s0 + $0x50] sm:$0xff]
    %v41 = vld [vmem:[%s0 + $0x58] sm:$0xff]
    %v42 = vld [vmem:[%s0 + $0x60] sm:$0xff]
    %v43 = vld [vmem:[%s0 + $0x68] sm:$0xff]
    %v44 = vld [vmem:[%s0 + $0x70] sm:$0xff]
    %v45 = vld [vmem:[%s0 + $0x78] sm:$0xff]
    %v46 = vpack.c.bf16 %v31, %v30
    %v47 = vpack.c.bf16 %v33, %v32
    %v48 = vpack.c.bf16 %v35, %v34
    %v49 = vpack.c.bf16 %v37, %v36
    %v50 = vpack.c.bf16 %v39, %v38
    %v51 = vpack.c.bf16 %v41, %v40
    %v52 = vpack.c.bf16 %v43, %v42
    %v53 = vpack.c.bf16 %v45, %v44
    %v54 = vld [vmem:[%s1] sm:$0xf]
    %v55 = vld [vmem:[%s1 + $0x4] sm:$0xf]
    %v56 = vld [vmem:[%s1 + $0x8] sm:$0xf]
    %v57 = vld [vmem:[%s1 + $0xc] sm:$0xf]
    %v58 = vld [vmem:[%s2] sm:$0x1]
    %v60 = vperm.slane %v58, 0
    %v66 = vunpack.c.l.b16 %v54
    %v67 = vunpack.c.l.b16 %v55
    %v68 = vunpack.c.l.b16 %v56
    %v69 = vunpack.c.l.b16 %v57
    %v70 = vpack.c.b16 %v67, %v66
    %v71 = vpack.c.b16 %v69, %v68
    %vm74 = vcmask 261120
    %v76 = vsel %vm74, %v46, 0
    %v79 = vsel %vm74, %v47, 0
    %v82 = vsel %vm74, %v48, 0
    %v85 = vsel %vm74, %v49, 0
    %v88 = vsel %vm74, %v50, 0
    %v91 = vsel %vm74, %v51, 0
    %v94 = vsel %vm74, %v52, 0
    %v97 = vsel %vm74, %v53, 0
    %99 = vmatpush.bf16.msra.mxu0 0
    %100 = vmatpush.bf16.msra.mxu0 0
    %101 = vmatpush.bf16.msra.mxu0 0
    %102 = vmatpush.bf16.msra.mxu0 0
    %103 = vmatpush.bf16.msra.mxu0 0
    %104 = vmatpush.bf16.msra.mxu0 0
    %105 = vmatpush.bf16.msra.mxu0 %v71
    %106 = vmatpush.bf16.msra.mxu0 %v70
    %107 = vmatmul.bf16.gmra.mxu0 %v76
    %v108 = vpop.f32.mrf.mxu0
    %v109 = vadd.f32 %v60, %v108
    %v110 = vpop.f32.mrf.mxu0
    %v111 = vadd.f32 %v60, %v110
    %112 = vmatmul.bf16.gmra.mxu0 %v79
    %v113 = vpop.f32.mrf.mxu0
    %v114 = vadd.f32 %v60, %v113
    %v115 = vpop.f32.mrf.mxu0
    %v116 = vadd.f32 %v60, %v115
    %117 = vmatmul.bf16.gmra.mxu0 %v82
    %v118 = vpop.f32.mrf.mxu0
    %v119 = vadd.f32 %v60, %v118
    %v120 = vpop.f32.mrf.mxu0
    %v121 = vadd.f32 %v60, %v120
    %122 = vmatmul.bf16.gmra.mxu0 %v85
    %v123 = vpop.f32.mrf.mxu0
    %v124 = vadd.f32 %v60, %v123
    %v125 = vpop.f32.mrf.mxu0
    %v126 = vadd.f32 %v60, %v125
    %127 = vmatmul.bf16.gmra.mxu0 %v88
    %v128 = vpop.f32.mrf.mxu0
    %v129 = vadd.f32 %v60, %v128
    %v130 = vpop.f32.mrf.mxu0
    %v131 = vadd.f32 %v60, %v130
    %132 = vmatmul.bf16.gmra.mxu0 %v91
    %v133 = vpop.f32.mrf.mxu0
    %v134 = vadd.f32 %v60, %v133
    %v135 = vpop.f32.mrf.mxu0
    %v136 = vadd.f32 %v60, %v135
    %137 = vmatmul.bf16.gmra.mxu0 %v94
    %v138 = vpop.f32.mrf.mxu0
    %v139 = vadd.f32 %v60, %v138
    %v140 = vpop.f32.mrf.mxu0
    %v141 = vadd.f32 %v60, %v140
    %142 = vmatmul.bf16.gmra.mxu0 %v97
    %v143 = vpop.f32.mrf.mxu0
    %v144 = vadd.f32 %v60, %v143
    %v145 = vpop.f32.mrf.mxu0
    %v146 = vadd.f32 %v60, %v145
    %147 = vdwg.mxu0
    %v148 = vmax.f32 %v109, 0.0
    %v149 = vmax.f32 %v111, 0.0
    %v150 = vmax.f32 %v114, 0.0
    %v151 = vmax.f32 %v116, 0.0
    %v152 = vmax.f32 %v119, 0.0
    %v153 = vmax.f32 %v121, 0.0
    %v154 = vmax.f32 %v124, 0.0
    %v155 = vmax.f32 %v126, 0.0
    %v156 = vmax.f32 %v129, 0.0
    %v157 = vmax.f32 %v131, 0.0
    %v158 = vmax.f32 %v134, 0.0
    %v159 = vmax.f32 %v136, 0.0
    %v160 = vmax.f32 %v139, 0.0
    %v161 = vmax.f32 %v141, 0.0
    %v162 = vmax.f32 %v144, 0.0
    %v163 = vmax.f32 %v146, 0.0
    %v164 = vpack.c.bf16 %v149, %v148
    %v165 = vpack.c.bf16 %v151, %v150
    %v166 = vpack.c.bf16 %v153, %v152
    %v167 = vpack.c.bf16 %v155, %v154
    %v168 = vpack.c.bf16 %v157, %v156
    %v169 = vpack.c.bf16 %v159, %v158
    %v170 = vpack.c.bf16 %v161, %v160
    %v171 = vpack.c.bf16 %v163, %v162
    %v172 = vld [vmem:[%s3] sm:$0xf]
    %v173 = vld [vmem:[%s3 + $0x4] sm:$0xf]
    %v174 = vld [vmem:[%s3 + $0x8] sm:$0xf]
    %v175 = vld [vmem:[%s3 + $0xc] sm:$0xf]
    %v176 = vld [vmem:[%s3 + $0x10] sm:$0xf]
    %v177 = vld [vmem:[%s3 + $0x14] sm:$0xf]
    %v178 = vld [vmem:[%s3 + $0x18] sm:$0xf]
    %v179 = vld [vmem:[%s3 + $0x1c] sm:$0xf]
    %v180 = vld [vmem:[%s4] sm:$0x1]
    %v182 = vperm.slane %v180, 0
    %v192 = vunpack.c.l.b16 %v172
    %v193 = vunpack.c.l.b16 %v173
    %v194 = vunpack.c.l.b16 %v174
    %v195 = vunpack.c.l.b16 %v175
    %v196 = vunpack.c.l.b16 %v176
    %v197 = vunpack.c.l.b16 %v177
    %v198 = vunpack.c.l.b16 %v178
    %v199 = vunpack.c.l.b16 %v179
    %v200 = vpack.c.b16 %v193, %v192
    %v201 = vpack.c.b16 %v195, %v194
    %v202 = vpack.c.b16 %v197, %v196
    %v203 = vpack.c.b16 %v199, %v198
    %vm208 = vcmask 523264
    %v210 = vsel %vm208, %v164, 0
    %v213 = vsel %vm208, %v165, 0
    %v216 = vsel %vm208, %v166, 0
    %v219 = vsel %vm208, %v167, 0
    %v222 = vsel %vm208, %v168, 0
    %v225 = vsel %vm208, %v169, 0
    %v228 = vsel %vm208, %v170, 0
    %v231 = vsel %vm208, %v171, 0
    %233 = vmatpush.bf16.msra.mxu0 0
    %234 = vmatpush.bf16.msra.mxu0 0
    %235 = vmatpush.bf16.msra.mxu0 0
    %236 = vmatpush.bf16.msra.mxu0 0
    %237 = vmatpush.bf16.msra.mxu0 %v203
    %238 = vmatpush.bf16.msra.mxu0 %v202
    %239 = vmatpush.bf16.msra.mxu0 %v201
    %240 = vmatpush.bf16.msra.mxu0 %v200
    %241 = vmatmul.bf16.gmra.mxu0 %v210
    %v242 = vpop.f32.mrf.mxu0
    %v243 = vadd.f32 %v182, %v242
    %v244 = vpop.f32.mrf.mxu0
    %v245 = vadd.f32 %v182, %v244
    %246 = vmatmul.bf16.gmra.mxu0 %v213
    %v247 = vpop.f32.mrf.mxu0
    %v248 = vadd.f32 %v182, %v247
    %v249 = vpop.f32.mrf.mxu0
    %v250 = vadd.f32 %v182, %v249
    %251 = vmatmul.bf16.gmra.mxu0 %v216
    %v252 = vpop.f32.mrf.mxu0
    %v253 = vadd.f32 %v182, %v252
    %v254 = vpop.f32.mrf.mxu0
    %v255 = vadd.f32 %v182, %v254
    %256 = vmatmul.bf16.gmra.mxu0 %v219
    %v257 = vpop.f32.mrf.mxu0
    %v258 = vadd.f32 %v182, %v257
    %v259 = vpop.f32.mrf.mxu0
    %v260 = vadd.f32 %v182, %v259
    %261 = vmatmul.bf16.gmra.mxu0 %v222
    %v262 = vpop.f32.mrf.mxu0
    %v263 = vadd.f32 %v182, %v262
    %v264 = vpop.f32.mrf.mxu0
    %v265 = vadd.f32 %v182, %v264
    %266 = vmatmul.bf16.gmra.mxu0 %v225
    %v267 = vpop.f32.mrf.mxu0
    %v268 = vadd.f32 %v182, %v267
    %v269 = vpop.f32.mrf.mxu0
    %v270 = vadd.f32 %v182, %v269
    %271 = vmatmul.bf16.gmra.mxu0 %v228
    %v272 = vpop.f32.mrf.mxu0
    %v273 = vadd.f32 %v182, %v272
    %v274 = vpop.f32.mrf.mxu0
    %v275 = vadd.f32 %v182, %v274
    %276 = vmatmul.bf16.gmra.mxu0 %v231
    %v277 = vpop.f32.mrf.mxu0
    %v278 = vadd.f32 %v182, %v277
    %v279 = vpop.f32.mrf.mxu0
    %v280 = vadd.f32 %v182, %v279
    %281 = vdwg.mxu0
    %v282 = vmax.f32 %v243, 0.0
    %v283 = vmax.f32 %v245, 0.0
    %v284 = vmax.f32 %v248, 0.0
    %v285 = vmax.f32 %v250, 0.0
    %v286 = vmax.f32 %v253, 0.0
    %v287 = vmax.f32 %v255, 0.0
    %v288 = vmax.f32 %v258, 0.0
    %v289 = vmax.f32 %v260, 0.0
    %v290 = vmax.f32 %v263, 0.0
    %v291 = vmax.f32 %v265, 0.0
    %v292 = vmax.f32 %v268, 0.0
    %v293 = vmax.f32 %v270, 0.0
    %v294 = vmax.f32 %v273, 0.0
    %v295 = vmax.f32 %v275, 0.0
    %v296 = vmax.f32 %v278, 0.0
    %v297 = vmax.f32 %v280, 0.0
    %v298 = vld [vmem:[%s5] sm:$0x1]
    %v300 = vperm.slane %v298, 0
    %v302 = vmul.f32 %v282, %v300
    %v303 = vmul.f32 %v283, %v300
    %v304 = vmul.f32 %v284, %v300
    %v305 = vmul.f32 %v285, %v300
    %v306 = vmul.f32 %v286, %v300
    %v307 = vmul.f32 %v287, %v300
    %v308 = vmul.f32 %v288, %v300
    %v309 = vmul.f32 %v289, %v300
    %v310 = vmul.f32 %v290, %v300
    %v311 = vmul.f32 %v291, %v300
    %v312 = vmul.f32 %v292, %v300
    %v313 = vmul.f32 %v293, %v300
    %v314 = vmul.f32 %v294, %v300
    %v315 = vmul.f32 %v295, %v300
    %v316 = vmul.f32 %v296, %v300
    %v317 = vmul.f32 %v297, %v300
    %v318 = vsel %vm74, %v302, 0.0
    %319 = vadd.xlane.f32.xlu0 %v318
    %v320 = vpop.xlane.xlu0 %319
    %v321 = vsel %vm74, %v303, 0.0
    %322 = vadd.xlane.f32.xlu0 %v321
    %v323 = vpop.xlane.xlu0 %322
    %v324 = vsel %vm74, %v304, 0.0
    %325 = vadd.xlane.f32.xlu0 %v324
    %v326 = vpop.xlane.xlu0 %325
    %v327 = vsel %vm74, %v305, 0.0
    %328 = vadd.xlane.f32.xlu0 %v327
    %v329 = vpop.xlane.xlu0 %328
    %v330 = vsel %vm74, %v306, 0.0
    %331 = vadd.xlane.f32.xlu0 %v330
    %v332 = vpop.xlane.xlu0 %331
    %v333 = vsel %vm74, %v307, 0.0
    %334 = vadd.xlane.f32.xlu0 %v333
    %v335 = vpop.xlane.xlu0 %334
    %v336 = vsel %vm74, %v308, 0.0
    %337 = vadd.xlane.f32.xlu0 %v336
    %v338 = vpop.xlane.xlu0 %337
    %v339 = vsel %vm74, %v309, 0.0
    %340 = vadd.xlane.f32.xlu0 %v339
    %v341 = vpop.xlane.xlu0 %340
    %v342 = vsel %vm74, %v310, 0.0
    %343 = vadd.xlane.f32.xlu0 %v342
    %v344 = vpop.xlane.xlu0 %343
    %v345 = vsel %vm74, %v311, 0.0
    %346 = vadd.xlane.f32.xlu0 %v345
    %v347 = vpop.xlane.xlu0 %346
    %v348 = vsel %vm74, %v312, 0.0
    %349 = vadd.xlane.f32.xlu0 %v348
    %v350 = vpop.xlane.xlu0 %349
    %v351 = vsel %vm74, %v313, 0.0
    %352 = vadd.xlane.f32.xlu0 %v351
    %v353 = vpop.xlane.xlu0 %352
    %v354 = vsel %vm74, %v314, 0.0
    %355 = vadd.xlane.f32.xlu0 %v354
    %v356 = vpop.xlane.xlu0 %355
    %v357 = vsel %vm74, %v315, 0.0
    %358 = vadd.xlane.f32.xlu0 %v357
    %v359 = vpop.xlane.xlu0 %358
    %v360 = vsel %vm74, %v316, 0.0
    %361 = vadd.xlane.f32.xlu0 %v360
    %v362 = vpop.xlane.xlu0 %361
    %v363 = vsel %vm74, %v317, 0.0
    %364 = vadd.xlane.f32.xlu0 %v363
    %v365 = vpop.xlane.xlu0 %364
    %v366 = vld [vmem:[#allocation2] sm:$0x1]
    %368 = vset.pattern.permute.xlu0 0
    %369 = vperm.xlu0 %368, %v366
    %v370 = vpop.permute.xlu0 %369
    %v372 = vperm.slane %v370, 0
    %v373 = vadd.f32 %v320, %v372
    %v374 = vadd.f32 %v323, %v372
    %v375 = vadd.f32 %v326, %v372
    %v376 = vadd.f32 %v329, %v372
    %v377 = vadd.f32 %v332, %v372
    %v378 = vadd.f32 %v335, %v372
    %v379 = vadd.f32 %v338, %v372
    %v380 = vadd.f32 %v341, %v372
    %v381 = vadd.f32 %v344, %v372
    %v382 = vadd.f32 %v347, %v372
    %v383 = vadd.f32 %v350, %v372
    %v384 = vadd.f32 %v353, %v372
    %v385 = vadd.f32 %v356, %v372
    %v386 = vadd.f32 %v359, %v372
    %v387 = vadd.f32 %v362, %v372
    %v388 = vadd.f32 %v365, %v372
    %v389 = vxor.u32 %v373, 2147483648
    %v390 = vxor.u32 %v374, 2147483648
    %v391 = vxor.u32 %v375, 2147483648
    %v392 = vxor.u32 %v376, 2147483648
    %v393 = vxor.u32 %v377, 2147483648
    %v394 = vxor.u32 %v378, 2147483648
    %v395 = vxor.u32 %v379, 2147483648
    %v396 = vxor.u32 %v380, 2147483648
    %v397 = vxor.u32 %v381, 2147483648
    %v398 = vxor.u32 %v382, 2147483648
    %v399 = vxor.u32 %v383, 2147483648
    %v400 = vxor.u32 %v384, 2147483648
    %v401 = vxor.u32 %v385, 2147483648
    %v402 = vxor.u32 %v386, 2147483648
    %v403 = vxor.u32 %v387, 2147483648
    %v404 = vxor.u32 %v388, 2147483648
    %v405 = vmul.f32 %v389, 1.442695
    %v406 = vpow.pop %v405
    %v407 = vmul.f32 %v390, 1.442695
    %v408 = vpow.pop %v407
    %v409 = vmul.f32 %v391, 1.442695
    %v410 = vpow.pop %v409
    %v411 = vmul.f32 %v392, 1.442695
    %v412 = vpow.pop %v411
    %v413 = vmul.f32 %v393, 1.442695
    %v414 = vpow.pop %v413
    %v415 = vmul.f32 %v394, 1.442695
    %v416 = vpow.pop %v415
    %v417 = vmul.f32 %v395, 1.442695
    %v418 = vpow.pop %v417
    %v419 = vmul.f32 %v396, 1.442695
    %v420 = vpow.pop %v419
    %v421 = vmul.f32 %v397, 1.442695
    %v422 = vpow.pop %v421
    %v423 = vmul.f32 %v398, 1.442695
    %v424 = vpow.pop %v423
    %v425 = vmul.f32 %v399, 1.442695
    %v426 = vpow.pop %v425
    %v427 = vmul.f32 %v400, 1.442695
    %v428 = vpow.pop %v427
    %v429 = vmul.f32 %v401, 1.442695
    %v430 = vpow.pop %v429
    %v431 = vmul.f32 %v402, 1.442695
    %v432 = vpow.pop %v431
    %v433 = vmul.f32 %v403, 1.442695
    %v434 = vpow.pop %v433
    %v435 = vmul.f32 %v404, 1.442695
    %v436 = vpow.pop %v435
    %v437 = vadd.f32 %v406, 1.0
    %v438 = vadd.f32 %v408, 1.0
    %v439 = vadd.f32 %v410, 1.0
    %v440 = vadd.f32 %v412, 1.0
    %v441 = vadd.f32 %v414, 1.0
    %v442 = vadd.f32 %v416, 1.0
    %v443 = vadd.f32 %v418, 1.0
    %v444 = vadd.f32 %v420, 1.0
    %v445 = vadd.f32 %v422, 1.0
    %v446 = vadd.f32 %v424, 1.0
    %v447 = vadd.f32 %v426, 1.0
    %v448 = vadd.f32 %v428, 1.0
    %v449 = vadd.f32 %v430, 1.0
    %v450 = vadd.f32 %v432, 1.0
    %v451 = vadd.f32 %v434, 1.0
    %v452 = vadd.f32 %v436, 1.0
    %v453 = vrcp.pop %v437
    %v454 = vmul.f32 %v437, %v453
    %v455 = vsub.f32 1.0, %v454
    %v456 = vmul.f32 %v453, %v455
    %v457 = vadd.f32 %v453, %v456
    %vm458 = vweird.f32 %v437
    %vm459 = vweird.f32 %v453
    %vm460 = vmor %vm458, %vm459
    %v461 = vsel %vm460, %v453, %v457
    %v462 = vand.u32 2147483647, %v437
    %vm463 = vcmp.eq.f32.partialorder %v462, 8.507059e+37
    %v464 = vand.u32 %v437, 2147483648
    %v465 = vor.u32 1.1754944e-38, %v464
    %v466 = vsel %vm463, %v465, %v461
    %v467 = vmul.f32 1.0, %v466
    %v468 = vrcp.pop %v438
    %v469 = vmul.f32 %v438, %v468
    %v470 = vsub.f32 1.0, %v469
    %v471 = vmul.f32 %v468, %v470
    %v472 = vadd.f32 %v468, %v471
    %vm473 = vweird.f32 %v438
    %vm474 = vweird.f32 %v468
    %vm475 = vmor %vm473, %vm474
    %v476 = vsel %vm475, %v468, %v472
    %v477 = vand.u32 2147483647, %v438
    %vm478 = vcmp.eq.f32.partialorder %v477, 8.507059e+37
    %v479 = vand.u32 %v438, 2147483648
    %v480 = vor.u32 1.1754944e-38, %v479
    %v481 = vsel %vm478, %v480, %v476
    %v482 = vmul.f32 1.0, %v481
    %v483 = vrcp.pop %v439
    %v484 = vmul.f32 %v439, %v483
    %v485 = vsub.f32 1.0, %v484
    %v486 = vmul.f32 %v483, %v485
    %v487 = vadd.f32 %v483, %v486
    %vm488 = vweird.f32 %v439
    %vm489 = vweird.f32 %v483
    %vm490 = vmor %vm488, %vm489
    %v491 = vsel %vm490, %v483, %v487
    %v492 = vand.u32 2147483647, %v439
    %vm493 = vcmp.eq.f32.partialorder %v492, 8.507059e+37
    %v494 = vand.u32 %v439, 2147483648
    %v495 = vor.u32 1.1754944e-38, %v494
    %v496 = vsel %vm493, %v495, %v491
    %v497 = vmul.f32 1.0, %v496
    %v498 = vrcp.pop %v440
    %v499 = vmul.f32 %v440, %v498
    %v500 = vsub.f32 1.0, %v499
    %v501 = vmul.f32 %v498, %v500
    %v502 = vadd.f32 %v498, %v501
    %vm503 = vweird.f32 %v440
    %vm504 = vweird.f32 %v498
    %vm505 = vmor %vm503, %vm504
    %v506 = vsel %vm505, %v498, %v502
    %v507 = vand.u32 2147483647, %v440
    %vm508 = vcmp.eq.f32.partialorder %v507, 8.507059e+37
    %v509 = vand.u32 %v440, 2147483648
    %v510 = vor.u32 1.1754944e-38, %v509
    %v511 = vsel %vm508, %v510, %v506
    %v512 = vmul.f32 1.0, %v511
    %v513 = vrcp.pop %v441
    %v514 = vmul.f32 %v441, %v513
    %v515 = vsub.f32 1.0, %v514
    %v516 = vmul.f32 %v513, %v515
    %v517 = vadd.f32 %v513, %v516
    %vm518 = vweird.f32 %v441
    %vm519 = vweird.f32 %v513
    %vm520 = vmor %vm518, %vm519
    %v521 = vsel %vm520, %v513, %v517
    %v522 = vand.u32 2147483647, %v441
    %vm523 = vcmp.eq.f32.partialorder %v522, 8.507059e+37
    %v524 = vand.u32 %v441, 2147483648
    %v525 = vor.u32 1.1754944e-38, %v524
    %v526 = vsel %vm523, %v525, %v521
    %v527 = vmul.f32 1.0, %v526
    %v528 = vrcp.pop %v442
    %v529 = vmul.f32 %v442, %v528
    %v530 = vsub.f32 1.0, %v529
    %v531 = vmul.f32 %v528, %v530
    %v532 = vadd.f32 %v528, %v531
    %vm533 = vweird.f32 %v442
    %vm534 = vweird.f32 %v528
    %vm535 = vmor %vm533, %vm534
    %v536 = vsel %vm535, %v528, %v532
    %v537 = vand.u32 2147483647, %v442
    %vm538 = vcmp.eq.f32.partialorder %v537, 8.507059e+37
    %v539 = vand.u32 %v442, 2147483648
    %v540 = vor.u32 1.1754944e-38, %v539
    %v541 = vsel %vm538, %v540, %v536
    %v542 = vmul.f32 1.0, %v541
    %v543 = vrcp.pop %v443
    %v544 = vmul.f32 %v443, %v543
    %v545 = vsub.f32 1.0, %v544
    %v546 = vmul.f32 %v543, %v545
    %v547 = vadd.f32 %v543, %v546
    %vm548 = vweird.f32 %v443
    %vm549 = vweird.f32 %v543
    %vm550 = vmor %vm548, %vm549
    %v551 = vsel %vm550, %v543, %v547
    %v552 = vand.u32 2147483647, %v443
    %vm553 = vcmp.eq.f32.partialorder %v552, 8.507059e+37
    %v554 = vand.u32 %v443, 2147483648
    %v555 = vor.u32 1.1754944e-38, %v554
    %v556 = vsel %vm553, %v555, %v551
    %v557 = vmul.f32 1.0, %v556
    %v558 = vrcp.pop %v444
    %v559 = vmul.f32 %v444, %v558
    %v560 = vsub.f32 1.0, %v559
    %v561 = vmul.f32 %v558, %v560
    %v562 = vadd.f32 %v558, %v561
    %vm563 = vweird.f32 %v444
    %vm564 = vweird.f32 %v558
    %vm565 = vmor %vm563, %vm564
    %v566 = vsel %vm565, %v558, %v562
    %v567 = vand.u32 2147483647, %v444
    %vm568 = vcmp.eq.f32.partialorder %v567, 8.507059e+37
    %v569 = vand.u32 %v444, 2147483648
    %v570 = vor.u32 1.1754944e-38, %v569
    %v571 = vsel %vm568, %v570, %v566
    %v572 = vmul.f32 1.0, %v571
    %v573 = vrcp.pop %v445
    %v574 = vmul.f32 %v445, %v573
    %v575 = vsub.f32 1.0, %v574
    %v576 = vmul.f32 %v573, %v575
    %v577 = vadd.f32 %v573, %v576
    %vm578 = vweird.f32 %v445
    %vm579 = vweird.f32 %v573
    %vm580 = vmor %vm578, %vm579
    %v581 = vsel %vm580, %v573, %v577
    %v582 = vand.u32 2147483647, %v445
    %vm583 = vcmp.eq.f32.partialorder %v582, 8.507059e+37
    %v584 = vand.u32 %v445, 2147483648
    %v585 = vor.u32 1.1754944e-38, %v584
    %v586 = vsel %vm583, %v585, %v581
    %v587 = vmul.f32 1.0, %v586
    %v588 = vrcp.pop %v446
    %v589 = vmul.f32 %v446, %v588
    %v590 = vsub.f32 1.0, %v589
    %v591 = vmul.f32 %v588, %v590
    %v592 = vadd.f32 %v588, %v591
    %vm593 = vweird.f32 %v446
    %vm594 = vweird.f32 %v588
    %vm595 = vmor %vm593, %vm594
    %v596 = vsel %vm595, %v588, %v592
    %v597 = vand.u32 2147483647, %v446
    %vm598 = vcmp.eq.f32.partialorder %v597, 8.507059e+37
    %v599 = vand.u32 %v446, 2147483648
    %v600 = vor.u32 1.1754944e-38, %v599
    %v601 = vsel %vm598, %v600, %v596
    %v602 = vmul.f32 1.0, %v601
    %v603 = vrcp.pop %v447
    %v604 = vmul.f32 %v447, %v603
    %v605 = vsub.f32 1.0, %v604
    %v606 = vmul.f32 %v603, %v605
    %v607 = vadd.f32 %v603, %v606
    %vm608 = vweird.f32 %v447
    %vm609 = vweird.f32 %v603
    %vm610 = vmor %vm608, %vm609
    %v611 = vsel %vm610, %v603, %v607
    %v612 = vand.u32 2147483647, %v447
    %vm613 = vcmp.eq.f32.partialorder %v612, 8.507059e+37
    %v614 = vand.u32 %v447, 2147483648
    %v615 = vor.u32 1.1754944e-38, %v614
    %v616 = vsel %vm613, %v615, %v611
    %v617 = vmul.f32 1.0, %v616
    %v618 = vrcp.pop %v448
    %v619 = vmul.f32 %v448, %v618
    %v620 = vsub.f32 1.0, %v619
    %v621 = vmul.f32 %v618, %v620
    %v622 = vadd.f32 %v618, %v621
    %vm623 = vweird.f32 %v448
    %vm624 = vweird.f32 %v618
    %vm625 = vmor %vm623, %vm624
    %v626 = vsel %vm625, %v618, %v622
    %v627 = vand.u32 2147483647, %v448
    %vm628 = vcmp.eq.f32.partialorder %v627, 8.507059e+37
    %v629 = vand.u32 %v448, 2147483648
    %v630 = vor.u32 1.1754944e-38, %v629
    %v631 = vsel %vm628, %v630, %v626
    %v632 = vmul.f32 1.0, %v631
    %v633 = vrcp.pop %v449
    %v634 = vmul.f32 %v449, %v633
    %v635 = vsub.f32 1.0, %v634
    %v636 = vmul.f32 %v633, %v635
    %v637 = vadd.f32 %v633, %v636
    %vm638 = vweird.f32 %v449
    %vm639 = vweird.f32 %v633
    %vm640 = vmor %vm638, %vm639
    %v641 = vsel %vm640, %v633, %v637
    %v642 = vand.u32 2147483647, %v449
    %vm643 = vcmp.eq.f32.partialorder %v642, 8.507059e+37
    %v644 = vand.u32 %v449, 2147483648
    %v645 = vor.u32 1.1754944e-38, %v644
    %v646 = vsel %vm643, %v645, %v641
    %v647 = vmul.f32 1.0, %v646
    %v648 = vrcp.pop %v450
    %v649 = vmul.f32 %v450, %v648
    %v650 = vsub.f32 1.0, %v649
    %v651 = vmul.f32 %v648, %v650
    %v652 = vadd.f32 %v648, %v651
    %vm653 = vweird.f32 %v450
    %vm654 = vweird.f32 %v648
    %vm655 = vmor %vm653, %vm654
    %v656 = vsel %vm655, %v648, %v652
    %v657 = vand.u32 2147483647, %v450
    %vm658 = vcmp.eq.f32.partialorder %v657, 8.507059e+37
    %v659 = vand.u32 %v450, 2147483648
    %v660 = vor.u32 1.1754944e-38, %v659
    %v661 = vsel %vm658, %v660, %v656
    %v662 = vmul.f32 1.0, %v661
    %v663 = vrcp.pop %v451
    %v664 = vmul.f32 %v451, %v663
    %v665 = vsub.f32 1.0, %v664
    %v666 = vmul.f32 %v663, %v665
    %v667 = vadd.f32 %v663, %v666
    %vm668 = vweird.f32 %v451
    %vm669 = vweird.f32 %v663
    %vm670 = vmor %vm668, %vm669
    %v671 = vsel %vm670, %v663, %v667
    %v672 = vand.u32 2147483647, %v451
    %vm673 = vcmp.eq.f32.partialorder %v672, 8.507059e+37
    %v674 = vand.u32 %v451, 2147483648
    %v675 = vor.u32 1.1754944e-38, %v674
    %v676 = vsel %vm673, %v675, %v671
    %v677 = vmul.f32 1.0, %v676
    %v678 = vrcp.pop %v452
    %v679 = vmul.f32 %v452, %v678
    %v680 = vsub.f32 1.0, %v679
    %v681 = vmul.f32 %v678, %v680
    %v682 = vadd.f32 %v678, %v681
    %vm683 = vweird.f32 %v452
    %vm684 = vweird.f32 %v678
    %vm685 = vmor %vm683, %vm684
    %v686 = vsel %vm685, %v678, %v682
    %v687 = vand.u32 2147483647, %v452
    %vm688 = vcmp.eq.f32.partialorder %v687, 8.507059e+37
    %v689 = vand.u32 %v452, 2147483648
    %v690 = vor.u32 1.1754944e-38, %v689
    %v691 = vsel %vm688, %v690, %v686
    %v692 = vmul.f32 1.0, %v691
    %v709 = vlaneseq
    %v710 = vand.u32 %v709, 127
    %v711 = vperm.slane %v467, %v710
    %v712 = vadd.s32 %v710, 4294967288
    %v713 = vperm.slane %v482, %v712
    %vm714 = vcmask 130112
    %v715 = vsel %vm714, %v713, %v711
    %v716 = vadd.s32 %v710, 4294967280
    %v717 = vperm.slane %v497, %v716
    %vm718 = vcmask 195712
    %v719 = vsel %vm718, %v717, %v715
    %v720 = vadd.s32 %v710, 4294967272
    %v721 = vperm.slane %v512, %v720
    %vm722 = vcmask 261312
    %v723 = vsel %vm722, %v721, %v719
    %v724 = vadd.s32 %v710, 4294967264
    %v725 = vperm.slane %v527, %v724
    %vm726 = vcmask 326912
    %v727 = vsel %vm726, %v725, %v723
    %v728 = vadd.s32 %v710, 4294967256
    %v729 = vperm.slane %v542, %v728
    %vm730 = vcmask 392512
    %v731 = vsel %vm730, %v729, %v727
    %v732 = vadd.s32 %v710, 4294967248
    %v733 = vperm.slane %v557, %v732
    %vm734 = vcmask 458112
    %v735 = vsel %vm734, %v733, %v731
    %v736 = vadd.s32 %v710, 4294967240
    %v737 = vperm.slane %v572, %v736
    %vm738 = vcmask 523712
    %v739 = vsel %vm738, %v737, %v735
    %v740 = vadd.s32 %v710, 4294967232
    %v741 = vperm.slane %v587, %v740
    %vm742 = vcmask 589312
    %v743 = vsel %vm742, %v741, %v739
    %v744 = vadd.s32 %v710, 4294967224
    %v745 = vperm.slane %v602, %v744
    %vm746 = vcmask 654912
    %v747 = vsel %vm746, %v745, %v743
    %v748 = vadd.s32 %v710, 4294967216
    %v749 = vperm.slane %v617, %v748
    %vm750 = vcmask 720512
    %v751 = vsel %vm750, %v749, %v747
    %v752 = vadd.s32 %v710, 4294967208
    %v753 = vperm.slane %v632, %v752
    %vm754 = vcmask 786112
    %v755 = vsel %vm754, %v753, %v751
    %v756 = vadd.s32 %v710, 4294967200
    %v757 = vperm.slane %v647, %v756
    %vm758 = vcmask 851712
    %v759 = vsel %vm758, %v757, %v755
    %v760 = vadd.s32 %v710, 4294967192
    %v761 = vperm.slane %v662, %v760
    %vm762 = vcmask 917312
    %v763 = vsel %vm762, %v761, %v759
    %v764 = vadd.s32 %v710, 4294967184
    %v765 = vperm.slane %v677, %v764
    %vm766 = vcmask 982912
    %v767 = vsel %vm766, %v765, %v763
    %v768 = vadd.s32 %v710, 4294967176
    %v769 = vperm.slane %v692, %v768
    %vm770 = vcmask 1048512
    %v771 = vsel %vm770, %v769, %v767
    %773 = vst [vmem:[#allocation3] sm:$0x1] %v771
    // Predicated region
    $region30: #{tpu_custom_call.1} parent=1 // pred_check
      _
    $region31: #{tpu_custom_call.1} parent=1 // pred_check_branch
      %775 = sbr.rel (0) target = $region33
    $region32: #{tpu_custom_call.1} parent=1 // pred_region
      %777 = vsyncadd [#allocation4], 0
      %s779 = sshll.u32 [#allocation3], 4
      %s780 = int_to_ptr.vmem [resolvable:$true] %s779
      %s781 = sshll.u32 %s7, 4
      %s782 = int_to_ptr.hbm [resolvable:$true] %s781
      %784 = dma.vmem_to_hbm [thread:$0]  %s780, 16, %s782, [#allocation4]
    $region33: #{tpu_custom_call.1} parent=1 // pred_fallthru
      _
    // Predicated region
    $region34: #{tpu_custom_call.1} parent=1 // pred_check
      _
    $region35: #{tpu_custom_call.1} parent=1 // pred_check_branch
      %786 = sbr.rel (0) target = $region37
    $region36: #{tpu_custom_call.1} parent=1 // pred_region
      %788 = dma.done [#allocation4], 16
    $region37: #{tpu_custom_call.1} parent=1 // pred_fallthru
      _
    %789 = vsyncpa [#allocation4], 1

</llo_original>
